<compile_context>
chip_gen: v5e
topology: v5e:2x2
jax: 0.10.0
libtpu: 0.0.40
codegen_flags: <defaults>
</compile_context>

<pallas_src>
import functools

import jax
import jax.numpy as jnp
from jax.experimental import pallas as pl
from jax.experimental.pallas import tpu as pltpu


def _round_up(x: int, m: int) -> int:
    return (x + m - 1) // m * m


def _tpu_specs():
    """Best-effort (physical VMEM bytes, approx MXU FLOP/s) for this chip."""
    vmem_cap = 64 << 20          # v7x-safe fallback
    mxu_flops = 200e12           # v5e-safe fallback
    try:
        info = pltpu.get_tpu_info()
        cap = int(getattr(info, "vmem_capacity_bytes", vmem_cap))
        if cap >= (16 << 20):
            vmem_cap = cap
        name = (str(getattr(info, "chip_version", ""))
                + str(getattr(info, "name", ""))).lower()
        if ("v5" not in name) and any(t in name for t in ("v6", "v7", "trillium")):
            mxu_flops = 900e12
    except Exception:
        pass
    return vmem_cap, mxu_flops


# ---------------------------------------------------------------------------
# Path A: table resident in VMEM, V-chunked one-hot MXU gather.
# ---------------------------------------------------------------------------
def _embed_onehot_kernel(tok_ref, table_ref, out_ref, acc_ref, *, scale, v_chunk):
    # tok_ref:   (T, 1) int32 token ids for this block (VMEM).
    # table_ref: (v_pad, D) full (zero-padded) embedding table, resident in VMEM.
    # out_ref:   (T, D) output slab (lane- and sublane-dense).
    # acc_ref:   (T, D) f32 accumulator scratch.
    ids = tok_ref[...]                                            # (T, 1)
    T = ids.shape[0]
    v_pad = table_ref.shape[0]
    n_chunks = v_pad // v_chunk                                   # static

    acc_ref[...] = jnp.zeros_like(acc_ref)
    # Hoisted out of the loop (JAX does not CSE broadcast_in_dim).
    lane = jax.lax.broadcasted_iota(jnp.int32, (T, v_chunk), 1)   # (T, Vc)

    @pl.loop(0, n_chunks)
    def _(c):
        base = pl.multiple_of(c * v_chunk, v_chunk)
        chunk = table_ref[pl.ds(base, v_chunk), :]                # (Vc, D)
        onehot = (lane == (ids - base)).astype(chunk.dtype)       # (T, Vc)
        acc_ref[...] += jnp.dot(onehot, chunk,
                                preferred_element_type=jnp.float32)

    out_ref[...] = (scale * acc_ref[...]).astype(out_ref.dtype)


def _embed_vmem_table(flat_tokens_2d, emb_table, *, block_tokens, v_chunk, scale,
                      vmem_limit, single_buffer_table):
    n_pad, _ = flat_tokens_2d.shape
    v_pad, D = emb_table.shape
    if single_buffer_table:
        # Constant index_map -> fetched once; single-buffer to halve table VMEM.
        table_spec = pl.BlockSpec((v_pad, D), lambda i: (0, 0),
                                  pipeline_mode=pl.Buffered(1))
    else:
        table_spec = pl.BlockSpec((v_pad, D), lambda i: (0, 0))
    return pl.pallas_call(
        functools.partial(_embed_onehot_kernel, scale=scale, v_chunk=v_chunk),
        out_shape=jax.ShapeDtypeStruct((n_pad, D), emb_table.dtype),
        grid=(n_pad // block_tokens,),
        in_specs=[
            pl.BlockSpec((block_tokens, 1), lambda i: (i, 0)),    # token ids
            table_spec,                                           # resident table
        ],
        out_specs=pl.BlockSpec((block_tokens, D), lambda i: (i, 0)),
        scratch_shapes=[pltpu.VMEM((block_tokens, D), jnp.float32)],
        compiler_params=pltpu.CompilerParams(
            dimension_semantics=("parallel",),
            vmem_limit_bytes=int(vmem_limit),
        ),
    )(flat_tokens_2d, emb_table)


# ---------------------------------------------------------------------------
# Path B: table stays in HBM; per-row gather DMAs straight into the output
# block with a deep rolling window; scale applied per retired row.
# ---------------------------------------------------------------------------
def _embed_gather_kernel(tok_ref, emb_hbm, out_ref, sems, *,
                         scale, block_tokens, window):
    # tok_ref: (N_pad,) int32 token ids in SMEM (scalar prefetch).
    # emb_hbm: (V, D) embedding table left in HBM (memory_space=pl.ANY).
    # out_ref: (T, D) output slab (VMEM); DMA destination.
    # sems:    (window,) DMA semaphores -> `window` row copies kept in flight.
    base = pl.program_id(0) * block_tokens

    def issue(t, tok):
        pltpu.make_async_copy(emb_hbm.at[tok], out_ref.at[t],
                              sems.at[t % window]).start()

    def wait_for(t):
        # Descriptor only needs matching shape/size; dst matches the real copy.
        pltpu.make_async_copy(emb_hbm.at[0], out_ref.at[t],
                              sems.at[t % window]).wait()

    def finish(t):
        out_ref[t] = (scale * out_ref[t].astype(jnp.float32)).astype(out_ref.dtype)

    # Prime the in-flight window.
    @pl.loop(0, window)
    def _(t):
        issue(t, tok_ref[base + t])

    # Steady state: read the next token id BEFORE the wait (keeps SMEM
    # sst->sld forwarding), retire the oldest copy, reuse its slot, and scale
    # the retired row while the remaining copies are still in flight.
    @pl.loop(window, block_tokens)
    def _(t):
        tok = tok_ref[base + t]
        r = t - window
        wait_for(r)
        issue(t, tok)
        finish(r)

    # Drain the remaining outstanding copies.
    @pl.loop(block_tokens - window, block_tokens)
    def _(t):
        wait_for(t)
        finish(t)


def _embed_hbm_gather(flat_tokens_1d, emb_table, *, block_tokens, scale, window,
                      vmem_limit):
    n_pad = flat_tokens_1d.shape[0]
    V, D = emb_table.shape
    return pl.pallas_call(
        functools.partial(_embed_gather_kernel, scale=scale,
                          block_tokens=block_tokens, window=window),
        out_shape=jax.ShapeDtypeStruct((n_pad, D), emb_table.dtype),
        grid_spec=pltpu.PrefetchScalarGridSpec(
            num_scalar_prefetch=1,                         # token ids -> SMEM
            grid=(n_pad // block_tokens,),
            in_specs=[pl.BlockSpec(memory_space=pl.ANY)],  # table stays in HBM
            out_specs=pl.BlockSpec((block_tokens, D), lambda i, tok: (i, 0)),
            scratch_shapes=[pltpu.SemaphoreType.DMA((window,))],
        ),
        compiler_params=pltpu.CompilerParams(
            dimension_semantics=("parallel",),
            vmem_limit_bytes=int(vmem_limit),
        ),
    )(flat_tokens_1d, emb_table)


# ---------------------------------------------------------------------------
# Public wrapper: TokenEmbedding.forward(tokens) = sqrt(D) * table[tokens]
# ---------------------------------------------------------------------------
def token_embedding(tokens: jax.Array, emb_table: jax.Array, *,
                    block_tokens: int = 256, v_chunk: int = 512,
                    dma_window: int = 32,
                    force_hbm_gather: bool = False) -> jax.Array:
    """tokens: (B, S) integer ids; emb_table: (V, D) float. Returns (B, S, D)."""
    B, S = tokens.shape
    V, D = emb_table.shape
    N = B * S
    scale = float(D) ** 0.5
    itemsize = jnp.dtype(emb_table.dtype).itemsize

    # Sublane-dense token block, but not bigger than the (padded) problem.
    T = max(8, min(block_tokens, _round_up(N, 8)))
    n_pad = _round_up(N, T)

    flat = tokens.reshape(N).astype(jnp.int32)
    if n_pad != N:
        flat = jnp.concatenate([flat, jnp.zeros((n_pad - N,), jnp.int32)])

    # V chunk for the one-hot matmul: MXU-shaped (multiple of 256) for big
    # vocabs, otherwise the whole (8-aligned) vocab in one chunk.
    if V <= v_chunk:
        vc = _round_up(V, 8)
    else:
        vc = _round_up(v_chunk, 256)
    v_pad = _round_up(V, vc)

    vmem_cap, mxu_flops = _tpu_specs()
    vmem_budget = (vmem_cap * 3) // 4        # leave headroom on any chip

    # Path-A VMEM footprint: single-buffered resident table + double-buffered
    # output block + f32 accumulator + chunked iota/one-hot intermediates.
    vmem_needed = (v_pad * D * itemsize
                   + 2 * T * D * itemsize
                   + T * D * 4
                   + 2 * T * vc * 4
                   + (2 << 20))

    # FLOPs-vs-latency gate: the one-hot matmul wastes T*V*D FLOPs; on weak
    # MXUs (v5e) with huge V*D the descriptor-bound gather can be faster.
    passes = 1.0 if itemsize <= 2 else 3.0   # f32 goes through multi-pass bf16
    matmul_s = 2.0 * n_pad * v_pad * D * passes / mxu_flops
    gather_s = max(N, 1) * 0.2e-6            # ~per-row DMA descriptor latency
    prefer_mxu = matmul_s <= 2.0 * gather_s

    if (vmem_needed <= vmem_budget) and prefer_mxu and not force_hbm_gather:
        table = emb_table
        if v_pad != V:
            table = jnp.pad(emb_table, ((0, v_pad - V), (0, 0)))
        vmem_limit = min(max(vmem_needed, 32 << 20),
                         max(vmem_cap - (8 << 20), 16 << 20))
        tok2d = flat.reshape(n_pad, 1)
        try:
            out_flat = _embed_vmem_table(
                tok2d, table, block_tokens=T, v_chunk=vc, scale=scale,
                vmem_limit=vmem_limit, single_buffer_table=True)
        except Exception:
            # pl.Buffered(1) not supported on this jax version -> default 2-buffer.
            out_flat = _embed_vmem_table(
                tok2d, table, block_tokens=T, v_chunk=vc, scale=scale,
                vmem_limit=vmem_limit, single_buffer_table=False)
    else:
        window = max(1, min(dma_window, T))
        vmem_limit = min(max(2 * T * D * itemsize + (4 << 20), 16 << 20),
                         max(vmem_cap - (8 << 20), 16 << 20))
        out_flat = _embed_hbm_gather(
            flat, emb_table, block_tokens=T, scale=scale,
            window=window, vmem_limit=vmem_limit)

    return out_flat[:N].reshape(B, S, D)


if __name__ == "__main__":
    key = jax.random.PRNGKey(0)

    # --- Small case (matches the module spec shapes) ------------------------
    vocab_size, embed_dim = 64, 128
    batch, seq = 2, 8
    k_emb, k_tok, k_emb2, k_tok2 = jax.random.split(key, 4)

    emb_table = jax.random.normal(k_emb, (vocab_size, embed_dim), dtype=jnp.float32)
    tokens = jax.random.randint(k_tok, (batch, seq), 0, vocab_size, dtype=jnp.int32)
    ref = (embed_dim ** 0.5) * emb_table[tokens]

    out = jax.block_until_ready(token_embedding(tokens, emb_table))
    assert out.shape == (batch, seq, embed_dim)
    assert jnp.allclose(out, ref, atol=1e-5, rtol=1e-5), "VMEM path mismatch (small)"

    out_g = jax.block_until_ready(
        token_embedding(tokens, emb_table, force_hbm_gather=True))
    assert jnp.allclose(out_g, ref, atol=1e-5, rtol=1e-5), "HBM-gather path mismatch (small)"

    # --- Medium case (multi-block grid, V-chunk loop, padded last block) ----
    vocab2, dim2 = 1000, 256
    batch2, seq2 = 4, 300
    emb_table2 = jax.random.normal(k_emb2, (vocab2, dim2), dtype=jnp.float32)
    tokens2 = jax.random.randint(k_tok2, (batch2, seq2), 0, vocab2, dtype=jnp.int32)
    ref2 = (dim2 ** 0.5) * emb_table2[tokens2]

    out2 = jax.block_until_ready(token_embedding(tokens2, emb_table2))
    assert out2.shape == (batch2, seq2, dim2)
    assert jnp.allclose(out2, ref2, atol=1e-5, rtol=1e-5), "VMEM path mismatch (medium)"

    out2_g = jax.block_until_ready(
        token_embedding(tokens2, emb_table2, force_hbm_gather=True))
    assert jnp.allclose(out2_g, ref2, atol=1e-5, rtol=1e-5), "HBM-gather path mismatch (medium)"

    print("KERNEL_OK")
</pallas_src>

<mosaic_0001>
module attributes {stable_mosaic.version = 11 : i64} {
  func.func @_embed_onehot_kernel(%arg0: i32, %arg1: memref<16x1xi32, #tpu.memory_space<vmem>>, %arg2: memref<64x128xf32, #tpu.memory_space<vmem>>, %arg3: memref<16x128xf32, #tpu.memory_space<vmem>>, %arg4: memref<16x128xf32, #tpu.memory_space<vmem>>) attributes {dimension_semantics = [#tpu.dimension_semantics<parallel>], iteration_bounds = array<i64: 1>, scalar_prefetch = 0 : i64, scratch_operands = 1 : i64, tpu.core_type = #tpu.core_type<tc>, window_params = [{transform_indices = @transform_0, window_bounds = array<i64: 16, 1>}, {pipeline_mode = #tpu.pipeline_mode<synchronous>, transform_indices = @transform_1, window_bounds = array<i64: 64, 128>}, {transform_indices = @transform_2, window_bounds = array<i64: 16, 128>}]} {
    %c0 = arith.constant 0 : index
    %c0_0 = arith.constant 0 : index
    %0 = vector.load %arg1[%c0, %c0_0] : memref<16x1xi32, #tpu.memory_space<vmem>>, vector<16x1xi32>
    %cst = arith.constant 0.000000e+00 : f32
    %1 = vector.broadcast %cst : f32 to vector<16x128xf32>
    %c0_1 = arith.constant 0 : index
    %c0_2 = arith.constant 0 : index
    %2 = vector.load %arg4[%c0_1, %c0_2] : memref<16x128xf32, #tpu.memory_space<vmem>>, vector<16x128xf32>
    tpu.vector_store %arg4[%c0_1, %c0_2], %1 {strides = array<i32>} : memref<16x128xf32, #tpu.memory_space<vmem>>, vector<16x128xf32>,
    %3 = tpu.iota {dimensions = array<i32: 1>} : vector<16x64xi32>
    %c0_i32 = arith.constant 0 : i32
    %c1_i32 = arith.constant 1 : i32
    %4 = arith.muli %c0_i32, %c1_i32 : i32
    %c0_i32_3 = arith.constant 0 : i32
    %5 = arith.addi %c0_i32_3, %4 : i32
    %c64_i32 = arith.constant 64 : i32
    %6 = arith.muli %5, %c64_i32 : i32
    %7 = tpu.assume_multiple %6, 64 : i32
    %8 = arith.index_cast %7 : i32 to index
    %c0_4 = arith.constant 0 : index
    %9 = vector.load %arg2[%8, %c0_4] : memref<64x128xf32, #tpu.memory_space<vmem>>, vector<64x128xf32>
    %10 = vector.broadcast %7 : i32 to vector<16x1xi32>
    %11 = arith.subi %0, %10 : vector<16x1xi32>
    %12 = vector.broadcast %11 : vector<16x1xi32> to vector<16x64xi32>
    %13 = arith.cmpi eq, %3, %12 : vector<16x64xi32>
    %14 = arith.extui %13 : vector<16x64xi1> to vector<16x64xi32>
    %15 = arith.sitofp %14 : vector<16x64xi32> to vector<16x64xf32>
    %c0_5 = arith.constant 0 : index
    %c0_6 = arith.constant 0 : index
    %16 = vector.load %arg4[%c0_5, %c0_6] : memref<16x128xf32, #tpu.memory_space<vmem>>, vector<16x128xf32>
    %cst_7 = arith.constant dense<0.000000e+00> : vector<16x128xf32>
    %17 = tpu.matmul %15, %9, %cst_7 {dimension_numbers = #tpu.dot_dimension_numbers<[1], [0], [0], [1], [0, 0, 1, 1], [], []>} : vector<16x64xf32>, vector<64x128xf32>, vector<16x128xf32> -> vector<16x128xf32>
    %18 = arith.addf %16, %17 : vector<16x128xf32>
    %c0_8 = arith.constant 0 : index
    %c0_9 = arith.constant 0 : index
    %19 = vector.load %arg4[%c0_8, %c0_9] : memref<16x128xf32, #tpu.memory_space<vmem>>, vector<16x128xf32>
    tpu.vector_store %arg4[%c0_8, %c0_9], %18 {strides = array<i32>} : memref<16x128xf32, #tpu.memory_space<vmem>>, vector<16x128xf32>,
    %c1_i32_10 = arith.constant 1 : i32
    %c0_11 = arith.constant 0 : index
    %c0_12 = arith.constant 0 : index
    %20 = vector.load %arg4[%c0_11, %c0_12] : memref<16x128xf32, #tpu.memory_space<vmem>>, vector<16x128xf32>
    %cst_13 = arith.constant 11.3137083 : f32
    %21 = vector.broadcast %cst_13 : f32 to vector<16x128xf32>
    %22 = arith.mulf %21, %20 : vector<16x128xf32>
    %c0_14 = arith.constant 0 : index
    %c0_15 = arith.constant 0 : index
    %23 = vector.load %arg3[%c0_14, %c0_15] : memref<16x128xf32, #tpu.memory_space<vmem>>, vector<16x128xf32>
    tpu.vector_store %arg3[%c0_14, %c0_15], %22 {strides = array<i32>} : memref<16x128xf32, #tpu.memory_space<vmem>>, vector<16x128xf32>,
    return
  }
  func.func @transform_0(%arg0: i32) -> (i32, i32) {
    %c0_i32 = arith.constant 0 : i32
    %c0_i32_0 = arith.constant 0 : i32
    return %arg0, %c0_i32 : i32, i32
  }
  func.func @transform_1(%arg0: i32) -> (i32, i32) {
    %c0_i32 = arith.constant 0 : i32
    %c0_i32_0 = arith.constant 0 : i32
    %c0_i32_1 = arith.constant 0 : i32
    return %c0_i32, %c0_i32_0 : i32, i32
  }
  func.func @transform_2(%arg0: i32) -> (i32, i32) {
    %c0_i32 = arith.constant 0 : i32
    %c0_i32_0 = arith.constant 0 : i32
    return %arg0, %c0_i32 : i32, i32
  }
}

module attributes {stable_mosaic.version = 11 : i64} {
  func.func @_embed_onehot_kernel(%arg0: i32, %arg1: memref<16x1xi32, #tpu.memory_space<vmem>>, %arg2: memref<64x128xf32, #tpu.memory_space<vmem>>, %arg3: memref<16x128xf32, #tpu.memory_space<vmem>>, %arg4: memref<16x128xf32, #tpu.memory_space<vmem>>) attributes {dimension_semantics = [#tpu.dimension_semantics<parallel>], iteration_bounds = array<i64: 1>, scalar_prefetch = 0 : i64, scratch_operands = 1 : i64, tpu.core_type = #tpu.core_type<tc>, window_params = [{transform_indices = @transform_0, window_bounds = array<i64: 16, 1>}, {pipeline_mode = #tpu.pipeline_mode<synchronous>, transform_indices = @transform_1, window_bounds = array<i64: 64, 128>}, {transform_indices = @transform_2, window_bounds = array<i64: 16, 128>}]} {
    %c0 = arith.constant 0 : index
    %c0_0 = arith.constant 0 : index
    %0 = vector.load %arg1[%c0, %c0_0] : memref<16x1xi32, #tpu.memory_space<vmem>>, vector<16x1xi32>
    %cst = arith.constant 0.000000e+00 : f32
    %1 = vector.broadcast %cst : f32 to vector<16x128xf32>
    %c0_1 = arith.constant 0 : index
    %c0_2 = arith.constant 0 : index
    %2 = vector.load %arg4[%c0_1, %c0_2] : memref<16x128xf32, #tpu.memory_space<vmem>>, vector<16x128xf32>
    tpu.vector_store %arg4[%c0_1, %c0_2], %1 {strides = array<i32>} : memref<16x128xf32, #tpu.memory_space<vmem>>, vector<16x128xf32>,
    %3 = tpu.iota {dimensions = array<i32: 1>} : vector<16x64xi32>
    %c0_i32 = arith.constant 0 : i32
    %c1_i32 = arith.constant 1 : i32
    %4 = arith.muli %c0_i32, %c1_i32 : i32
    %c0_i32_3 = arith.constant 0 : i32
    %5 = arith.addi %c0_i32_3, %4 : i32
    %c64_i32 = arith.constant 64 : i32
    %6 = arith.muli %5, %c64_i32 : i32
    %7 = tpu.assume_multiple %6, 64 : i32
    %8 = arith.index_cast %7 : i32 to index
    %c0_4 = arith.constant 0 : index
    %9 = vector.load %arg2[%8, %c0_4] : memref<64x128xf32, #tpu.memory_space<vmem>>, vector<64x128xf32>
    %10 = vector.broadcast %7 : i32 to vector<16x1xi32>
    %11 = arith.subi %0, %10 : vector<16x1xi32>
    %12 = vector.broadcast %11 : vector<16x1xi32> to vector<16x64xi32>
    %13 = arith.cmpi eq, %3, %12 : vector<16x64xi32>
    %14 = arith.extui %13 : vector<16x64xi1> to vector<16x64xi32>
    %15 = arith.sitofp %14 : vector<16x64xi32> to vector<16x64xf32>
    %c0_5 = arith.constant 0 : index
    %c0_6 = arith.constant 0 : index
    %16 = vector.load %arg4[%c0_5, %c0_6] : memref<16x128xf32, #tpu.memory_space<vmem>>, vector<16x128xf32>
    %cst_7 = arith.constant dense<0.000000e+00> : vector<16x128xf32>
    %17 = tpu.matmul %15, %9, %cst_7 {dimension_numbers = #tpu.dot_dimension_numbers<[1], [0], [0], [1], [0, 0, 1, 1], [], []>} : vector<16x64xf32>, vector<64x128xf32>, vector<16x128xf32> -> vector<16x128xf32>
    %18 = arith.addf %16, %17 : vector<16x128xf32>
    %c0_8 = arith.constant 0 : index
    %c0_9 = arith.constant 0 : index
    %19 = vector.load %arg4[%c0_8, %c0_9] : memref<16x128xf32, #tpu.memory_space<vmem>>, vector<16x128xf32>
    tpu.vector_store %arg4[%c0_8, %c0_9], %18 {strides = array<i32>} : memref<16x128xf32, #tpu.memory_space<vmem>>, vector<16x128xf32>,
    %c1_i32_10 = arith.constant 1 : i32
    %c0_11 = arith.constant 0 : index
    %c0_12 = arith.constant 0 : index
    %20 = vector.load %arg4[%c0_11, %c0_12] : memref<16x128xf32, #tpu.memory_space<vmem>>, vector<16x128xf32>
    %cst_13 = arith.constant 11.3137083 : f32
    %21 = vector.broadcast %cst_13 : f32 to vector<16x128xf32>
    %22 = arith.mulf %21, %20 : vector<16x128xf32>
    %c0_14 = arith.constant 0 : index
    %c0_15 = arith.constant 0 : index
    %23 = vector.load %arg3[%c0_14, %c0_15] : memref<16x128xf32, #tpu.memory_space<vmem>>, vector<16x128xf32>
    tpu.vector_store %arg3[%c0_14, %c0_15], %22 {strides = array<i32>} : memref<16x128xf32, #tpu.memory_space<vmem>>, vector<16x128xf32>,
    return
  }
  func.func @transform_0(%arg0: i32) -> (i32, i32) {
    %c0_i32 = arith.constant 0 : i32
    %c0_i32_0 = arith.constant 0 : i32
    return %arg0, %c0_i32 : i32, i32
  }
  func.func @transform_1(%arg0: i32) -> (i32, i32) {
    %c0_i32 = arith.constant 0 : i32
    %c0_i32_0 = arith.constant 0 : i32
    %c0_i32_1 = arith.constant 0 : i32
    return %c0_i32, %c0_i32_0 : i32, i32
  }
  func.func @transform_2(%arg0: i32) -> (i32, i32) {
    %c0_i32 = arith.constant 0 : i32
    %c0_i32_0 = arith.constant 0 : i32
    return %arg0, %c0_i32 : i32, i32
  }
}

</mosaic_0001>

<llo_original>
// kernel: tpu_custom_call.1
$region0: #{tpu_custom_call.1}
  #allocation0 [shape = 'u32[]', space=smem, size = 0x4, offset = 0x4, fixed_abs, tag = 'smem constant byte address 0x4 - core index']
  #allocation1 [shape = 'u32[72,128]{1,0:T(1,128)}', space=vmem, size = 0x9000, scoped, tag = 'internal scratch']
  #allocation2 [shape = 'f32[16,128]{1,0:T(8,128)}', space=vmem, size = 0x2000, scoped, tag = 'scratch operand']
  %s0 = inlined_call_operand.vmem [shape: s32[16,1], index: 0, kind: input, shape index: {}]
  %s1 = inlined_call_operand.hbm [shape: f32[64,128], index: 1, kind: input, shape index: {}]
  %s2 = inlined_call_operand.hbm [shape: f32[16,128], index: 2, kind: output, shape index: {}]
  %s3 = sld [smem:[#allocation0]]
  $region22: #{tpu_custom_call.1} parent=0
    _
  %s5 = ssub.s32 1, %s3
  %s6 = scalar_select 0, %s5, %s3
  $region1: #{tpu_custom_call.1} parent=0
    #allocation3 [shape = 'u8[32768]{0}', space=vmem, size = 0x8000, scoped, tag = 'input window, operand 1, single buffered']
    #allocation4 [shape = 's32[1]{0}', space=sflag, size = 0x4, scoped, tag = 'scoped memory for tpu_custom_call.1']
    #allocation5 [shape = 's32[1]{0}', space=sflag, size = 0x4, scoped, tag = 'scoped memory for tpu_custom_call.1']
    #allocation6 [shape = 'u8[8192]{0}', space=vmem, size = 0x2000, scoped, tag = 'output window, operand 0, single buffered']
    %7 = vsyncpa [#allocation4], 0
    %8 = vsyncpa [#allocation5], 0
    // Predicated region
    $region2: #{tpu_custom_call.1} parent=1 // pred_check
      _
    $region3: #{tpu_custom_call.1} parent=1 // pred_check_branch
      %10 = sbr.rel (0) target = $region5
    $region4: #{tpu_custom_call.1} parent=1 // pred_region
      _
    $region5: #{tpu_custom_call.1} parent=1 // pred_fallthru
      _
    // Predicated region
    $region6: #{tpu_custom_call.1} parent=1 // pred_check
      _
    $region7: #{tpu_custom_call.1} parent=1 // pred_check_branch
      %12 = sbr.rel (0) target = $region9
    $region8: #{tpu_custom_call.1} parent=1 // pred_region
      %14 = vsyncadd [#allocation4], 0
      %s15 = sshll.u32 %s1, 4
      %s16 = int_to_ptr.hbm [resolvable:$true] %s15
      %s17 = sshll.u32 [#allocation3], 4
      %s18 = int_to_ptr.vmem [resolvable:$true] %s17
      %23 = dma.hbm_to_vmem [thread:$0]  %s16, 1024, %s18, [#allocation4], 128, 128, 8
    $region9: #{tpu_custom_call.1} parent=1 // pred_fallthru
      _
    // Predicated region
    $region10: #{tpu_custom_call.1} parent=1 // pred_check
      _
    $region11: #{tpu_custom_call.1} parent=1 // pred_check_branch
      %25 = sbr.rel (0) target = $region13
    $region12: #{tpu_custom_call.1} parent=1 // pred_region
      %27 = dma.done [#allocation4], 1024
    $region13: #{tpu_custom_call.1} parent=1 // pred_fallthru
      _
    %v28 = vld [vmem:[%s0] sm:$0xff]
    %v29 = vld [vmem:[%s0 + $0x8] sm:$0xff]
    %30 = vst [vmem:[#allocation2] sm:$0xff] 0.0
    %31 = vst [vmem:[#allocation2 + $0x8] sm:$0xff] 0.0
    %v32 = vlaneseq
    %v33 = vand.u32 %v32, 127
    %v34 = vld [vmem:[#allocation3] sm:$0xff]
    %v35 = vld [vmem:[#allocation3 + $0x8] sm:$0xff]
    %v36 = vld [vmem:[#allocation3 + $0x10] sm:$0xff]
    %v37 = vld [vmem:[#allocation3 + $0x18] sm:$0xff]
    %v38 = vld [vmem:[#allocation3 + $0x20] sm:$0xff]
    %v39 = vld [vmem:[#allocation3 + $0x28] sm:$0xff]
    %v40 = vld [vmem:[#allocation3 + $0x30] sm:$0xff]
    %v41 = vld [vmem:[#allocation3 + $0x38] sm:$0xff]
    %v42 = vstv 0
    %v43 = vsub.s32 %v28, %v42
    %v44 = vsub.s32 %v29, %v42
    %45 = vset.pattern.permute.xlu0 0
    %46 = vperm.xlu0 %45, %v43
    %v47 = vpop.permute.xlu0 %46
    %48 = vset.pattern.permute.xlu0 0
    %49 = vperm.xlu0 %48, %v44
    %v50 = vpop.permute.xlu0 %49
    %vm51 = vcmp.eq.s32.totalorder %v33, %v47
    %vm52 = vcmp.eq.s32.totalorder %v33, %v50
    %v53 = vsel %vm51, 1, 0
    %v54 = vsel %vm52, 1, 0
    %v55 = vcvt.s32.f32 %v53
    %v56 = vcvt.s32.f32 %v54
    %v57 = vld [vmem:[#allocation2] sm:$0xff]
    %v58 = vld [vmem:[#allocation2 + $0x8] sm:$0xff]
    %vm59 = vcmask 523264
    %v61 = vsel %vm59, %v55, 0
    %v64 = vsel %vm59, %v56, 0
    %66 = vmatpush.msra.mxu0 0.0
    %67 = vmatpush.msra.mxu0 0.0
    %68 = vmatpush.msra.mxu0 0.0
    %69 = vmatpush.msra.mxu0 0.0
    %70 = vmatpush.msra.mxu0 0.0
    %71 = vmatpush.msra.mxu0 0.0
    %72 = vmatpush.msra.mxu0 0.0
    %73 = vmatpush.msra.mxu0 0.0
    %74 = vmatpush.msra.mxu0 %v41
    %75 = vmatpush.msra.mxu0 %v40
    %76 = vmatpush.msra.mxu0 %v39
    %77 = vmatpush.msra.mxu0 %v38
    %78 = vmatpush.msra.mxu0 %v37
    %79 = vmatpush.msra.mxu0 %v36
    %80 = vmatpush.msra.mxu0 %v35
    %81 = vmatpush.msra.mxu0 %v34
    %82 = vmatmul.f32.gmra.mxu0 %v61
    %v83 = vpop.f32.mrf.mxu0
    %v84 = vadd.f32 0.0, %v83
    %85 = vmatmul.f32.gmra.mxu0 %v64
    %v86 = vpop.f32.mrf.mxu0
    %v87 = vadd.f32 0.0, %v86
    %88 = vdwg.mxu0
    %v89 = vadd.f32 %v57, %v84
    %v90 = vadd.f32 %v58, %v87
    %91 = vst [vmem:[#allocation2] sm:$0xff] %v89
    %92 = vst [vmem:[#allocation2 + $0x8] sm:$0xff] %v90
    %v93 = vld [vmem:[#allocation2] sm:$0xff]
    %v94 = vld [vmem:[#allocation2 + $0x8] sm:$0xff]
    %v95 = vmul.f32 %v93, 11.313708
    %v96 = vmul.f32 %v94, 11.313708
    %97 = vst [vmem:[#allocation6] sm:$0xff] %v95
    %98 = vst [vmem:[#allocation6 + $0x8] sm:$0xff] %v96
    // Predicated region
    $region14: #{tpu_custom_call.1} parent=1 // pred_check
      _
    $region15: #{tpu_custom_call.1} parent=1 // pred_check_branch
      %100 = sbr.rel (0) target = $region17
    $region16: #{tpu_custom_call.1} parent=1 // pred_region
      %102 = vsyncadd [#allocation5], 0
      %s103 = sshll.u32 [#allocation6], 4
      %s104 = int_to_ptr.vmem [resolvable:$true] %s103
      %s105 = sshll.u32 %s2, 4
      %s106 = int_to_ptr.hbm [resolvable:$true] %s105
      %111 = dma.vmem_to_hbm [thread:$0]  %s104, 256, %s106, [#allocation5], 128, 128, 8
    $region17: #{tpu_custom_call.1} parent=1 // pred_fallthru
      _
    // Predicated region
    $region18: #{tpu_custom_call.1} parent=1 // pred_check
      _
    $region19: #{tpu_custom_call.1} parent=1 // pred_check_branch
      %113 = sbr.rel (0) target = $region21
    $region20: #{tpu_custom_call.1} parent=1 // pred_region
      %115 = dma.done [#allocation5], 256
    $region21: #{tpu_custom_call.1} parent=1 // pred_fallthru
      _
    %116 = vsyncpa [#allocation4], 1
    %117 = vsyncpa [#allocation5], 1

// kernel: tpu_custom_call.1
$region0: #{tpu_custom_call.1}
  #allocation0 [shape = 'u32[]', space=smem, size = 0x4, offset = 0x4, fixed_abs, tag = 'smem constant byte address 0x4 - core index']
  #allocation1 [shape = 'u32[72,128]{1,0:T(1,128)}', space=vmem, size = 0x9000, scoped, tag = 'internal scratch']
  #allocation2 [shape = 'f32[16,128]{1,0:T(8,128)}', space=vmem, size = 0x2000, scoped, tag = 'scratch operand']
  %s0 = inlined_call_operand.vmem [shape: s32[16,1], index: 0, kind: input, shape index: {}]
  %s1 = inlined_call_operand.hbm [shape: f32[64,128], index: 1, kind: input, shape index: {}]
  %s2 = inlined_call_operand.hbm [shape: f32[16,128], index: 2, kind: output, shape index: {}]
  %s3 = sld [smem:[#allocation0]]
  $region22: #{tpu_custom_call.1} parent=0
    _
  %s5 = ssub.s32 1, %s3
  %s6 = scalar_select 0, %s5, %s3
  $region1: #{tpu_custom_call.1} parent=0
    #allocation3 [shape = 'u8[32768]{0}', space=vmem, size = 0x8000, scoped, tag = 'input window, operand 1, single buffered']
    #allocation4 [shape = 's32[1]{0}', space=sflag, size = 0x4, scoped, tag = 'scoped memory for tpu_custom_call.1']
    #allocation5 [shape = 's32[1]{0}', space=sflag, size = 0x4, scoped, tag = 'scoped memory for tpu_custom_call.1']
    #allocation6 [shape = 'u8[8192]{0}', space=vmem, size = 0x2000, scoped, tag = 'output window, operand 0, single buffered']
    %7 = vsyncpa [#allocation4], 0
    %8 = vsyncpa [#allocation5], 0
    // Predicated region
    $region2: #{tpu_custom_call.1} parent=1 // pred_check
      _
    $region3: #{tpu_custom_call.1} parent=1 // pred_check_branch
      %10 = sbr.rel (0) target = $region5
    $region4: #{tpu_custom_call.1} parent=1 // pred_region
      _
    $region5: #{tpu_custom_call.1} parent=1 // pred_fallthru
      _
    // Predicated region
    $region6: #{tpu_custom_call.1} parent=1 // pred_check
      _
    $region7: #{tpu_custom_call.1} parent=1 // pred_check_branch
      %12 = sbr.rel (0) target = $region9
    $region8: #{tpu_custom_call.1} parent=1 // pred_region
      %14 = vsyncadd [#allocation4], 0
      %s15 = sshll.u32 %s1, 4
      %s16 = int_to_ptr.hbm [resolvable:$true] %s15
      %s17 = sshll.u32 [#allocation3], 4
      %s18 = int_to_ptr.vmem [resolvable:$true] %s17
      %23 = dma.hbm_to_vmem [thread:$0]  %s16, 1024, %s18, [#allocation4], 128, 128, 8
    $region9: #{tpu_custom_call.1} parent=1 // pred_fallthru
      _
    // Predicated region
    $region10: #{tpu_custom_call.1} parent=1 // pred_check
      _
    $region11: #{tpu_custom_call.1} parent=1 // pred_check_branch
      %25 = sbr.rel (0) target = $region13
    $region12: #{tpu_custom_call.1} parent=1 // pred_region
      %27 = dma.done [#allocation4], 1024
    $region13: #{tpu_custom_call.1} parent=1 // pred_fallthru
      _
    %v28 = vld [vmem:[%s0] sm:$0xff]
    %v29 = vld [vmem:[%s0 + $0x8] sm:$0xff]
    %30 = vst [vmem:[#allocation2] sm:$0xff] 0.0
    %31 = vst [vmem:[#allocation2 + $0x8] sm:$0xff] 0.0
    %v32 = vlaneseq
    %v33 = vand.u32 %v32, 127
    %v34 = vld [vmem:[#allocation3] sm:$0xff]
    %v35 = vld [vmem:[#allocation3 + $0x8] sm:$0xff]
    %v36 = vld [vmem:[#allocation3 + $0x10] sm:$0xff]
    %v37 = vld [vmem:[#allocation3 + $0x18] sm:$0xff]
    %v38 = vld [vmem:[#allocation3 + $0x20] sm:$0xff]
    %v39 = vld [vmem:[#allocation3 + $0x28] sm:$0xff]
    %v40 = vld [vmem:[#allocation3 + $0x30] sm:$0xff]
    %v41 = vld [vmem:[#allocation3 + $0x38] sm:$0xff]
    %v42 = vstv 0
    %v43 = vsub.s32 %v28, %v42
    %v44 = vsub.s32 %v29, %v42
    %45 = vset.pattern.permute.xlu0 0
    %46 = vperm.xlu0 %45, %v43
    %v47 = vpop.permute.xlu0 %46
    %48 = vset.pattern.permute.xlu0 0
    %49 = vperm.xlu0 %48, %v44
    %v50 = vpop.permute.xlu0 %49
    %vm51 = vcmp.eq.s32.totalorder %v33, %v47
    %vm52 = vcmp.eq.s32.totalorder %v33, %v50
    %v53 = vsel %vm51, 1, 0
    %v54 = vsel %vm52, 1, 0
    %v55 = vcvt.s32.f32 %v53
    %v56 = vcvt.s32.f32 %v54
    %v57 = vld [vmem:[#allocation2] sm:$0xff]
    %v58 = vld [vmem:[#allocation2 + $0x8] sm:$0xff]
    %vm59 = vcmask 523264
    %v61 = vsel %vm59, %v55, 0
    %v64 = vsel %vm59, %v56, 0
    %66 = vmatpush.msra.mxu0 0.0
    %67 = vmatpush.msra.mxu0 0.0
    %68 = vmatpush.msra.mxu0 0.0
    %69 = vmatpush.msra.mxu0 0.0
    %70 = vmatpush.msra.mxu0 0.0
    %71 = vmatpush.msra.mxu0 0.0
    %72 = vmatpush.msra.mxu0 0.0
    %73 = vmatpush.msra.mxu0 0.0
    %74 = vmatpush.msra.mxu0 %v41
    %75 = vmatpush.msra.mxu0 %v40
    %76 = vmatpush.msra.mxu0 %v39
    %77 = vmatpush.msra.mxu0 %v38
    %78 = vmatpush.msra.mxu0 %v37
    %79 = vmatpush.msra.mxu0 %v36
    %80 = vmatpush.msra.mxu0 %v35
    %81 = vmatpush.msra.mxu0 %v34
    %82 = vmatmul.f32.gmra.mxu0 %v61
    %v83 = vpop.f32.mrf.mxu0
    %v84 = vadd.f32 0.0, %v83
    %85 = vmatmul.f32.gmra.mxu0 %v64
    %v86 = vpop.f32.mrf.mxu0
    %v87 = vadd.f32 0.0, %v86
    %88 = vdwg.mxu0
    %v89 = vadd.f32 %v57, %v84
    %v90 = vadd.f32 %v58, %v87
    %91 = vst [vmem:[#allocation2] sm:$0xff] %v89
    %92 = vst [vmem:[#allocation2 + $0x8] sm:$0xff] %v90
    %v93 = vld [vmem:[#allocation2] sm:$0xff]
    %v94 = vld [vmem:[#allocation2 + $0x8] sm:$0xff]
    %v95 = vmul.f32 %v93, 11.313708
    %v96 = vmul.f32 %v94, 11.313708
    %97 = vst [vmem:[#allocation6] sm:$0xff] %v95
    %98 = vst [vmem:[#allocation6 + $0x8] sm:$0xff] %v96
    // Predicated region
    $region14: #{tpu_custom_call.1} parent=1 // pred_check
      _
    $region15: #{tpu_custom_call.1} parent=1 // pred_check_branch
      %100 = sbr.rel (0) target = $region17
    $region16: #{tpu_custom_call.1} parent=1 // pred_region
      %102 = vsyncadd [#allocation5], 0
      %s103 = sshll.u32 [#allocation6], 4
      %s104 = int_to_ptr.vmem [resolvable:$true] %s103
      %s105 = sshll.u32 %s2, 4
      %s106 = int_to_ptr.hbm [resolvable:$true] %s105
      %111 = dma.vmem_to_hbm [thread:$0]  %s104, 256, %s106, [#allocation5], 128, 128, 8
    $region17: #{tpu_custom_call.1} parent=1 // pred_fallthru
      _
    // Predicated region
    $region18: #{tpu_custom_call.1} parent=1 // pred_check
      _
    $region19: #{tpu_custom_call.1} parent=1 // pred_check_branch
      %113 = sbr.rel (0) target = $region21
    $region20: #{tpu_custom_call.1} parent=1 // pred_region
      %115 = dma.done [#allocation5], 256
    $region21: #{tpu_custom_call.1} parent=1 // pred_fallthru
      _
    %116 = vsyncpa [#allocation4], 1
    %117 = vsyncpa [#allocation5], 1

</llo_original>
